<compile_context>
chip_gen: v6e
topology: v6e:2x2x1
jax: 0.10.0
libtpu: 0.0.40
codegen_flags: <defaults>
</compile_context>

<pallas_src>
import functools

import jax
import jax.numpy as jnp
from jax.experimental import pallas as pl
from jax.experimental.pallas import tpu as pltpu

_LANE = 128  # lane width: class dims padded to multiples of this


def _round_up(x, m):
    return ((x + m - 1) // m) * m


def _cdiv(a, b):
    return (a + b - 1) // b


def _vmem_capacity_bytes():
    try:
        cap = getattr(pltpu.get_tpu_info(), "vmem_capacity_bytes", None)
        if cap:
            return int(cap)
    except Exception:
        pass
    return 128 << 20


_VMEM_CAP = _vmem_capacity_bytes()
# Bigger row tiles where VMEM allows (v5e/v6e: 128 MiB), tighter on v7x (64 MiB).
_TM_MAX = 512 if _VMEM_CAP >= (100 << 20) else 256


def _row_tile(n):
    """Row tile TM (multiple of 8). Guarantees >= 2 grid steps when possible
    so ("parallel",) grid semantics shard tiles across both TCs on v7x."""
    n8 = _round_up(max(int(n), 1), 8)
    if n8 <= 8:
        return 8
    return min(_TM_MAX, _round_up(_cdiv(n8, 2), 8))


def _vmem_limit_bytes(tm, d, c_total, n_streams):
    est = (2 * n_streams * tm * d * 4           # double-buffered f32 activation tiles
           + 2 * d * c_total * 2                # bf16 weights (worst-case 2 buffers)
           + 2 * c_total * 4                    # f32 biases
           + 2 * n_streams * tm * c_total * 4)  # double-buffered f32 output tiles
    lim = max(int(1.4 * est), 16 << 20)
    return int(min(lim, int(0.7 * _VMEM_CAP)))


# ----------------------------------------------------------------------------
# Pallas kernels
# ----------------------------------------------------------------------------
def _dual_head_kernel(x_ref, u_ref, wo_ref, bo_ref, wr_ref, br_ref,
                      obj_ref, rel_ref, *, steps_x, steps_u, cdt):
    # x_ref/u_ref: (TM, D) f32; wo_ref: (D, Co) bf16; wr_ref: (D, Cr) bf16
    # bo_ref: (1, Co) f32;  br_ref: (1, Cr) f32
    i = pl.program_id(0)

    @pl.when(i < steps_x)  # skip the obj head past its real row tiles
    def _():
        acc = jnp.dot(x_ref[...].astype(cdt), wo_ref[...],
                      preferred_element_type=jnp.float32)
        obj_ref[...] = (acc + bo_ref[...]).astype(obj_ref.dtype)

    @pl.when(i < steps_u)  # symmetric guard for the rel head
    def _():
        acc = jnp.dot(u_ref[...].astype(cdt), wr_ref[...],
                      preferred_element_type=jnp.float32)
        rel_ref[...] = (acc + br_ref[...]).astype(rel_ref.dtype)


def _single_head_kernel(u_ref, w_ref, b_ref, o_ref, *, cdt):
    acc = jnp.dot(u_ref[...].astype(cdt), w_ref[...],
                  preferred_element_type=jnp.float32)
    o_ref[...] = (acc + b_ref[...]).astype(o_ref.dtype)


def _onehot_kernel(lbl_ref, o_ref, *, on_value, off_value):
    # lbl_ref: (TM, 1) int32, o_ref: (TM, C_pad) f32 (lane-dense)
    cols = jax.lax.broadcasted_iota(jnp.int32, o_ref.shape, 1)
    o_ref[...] = jnp.where(cols == lbl_ref[...], jnp.float32(on_value),
                           jnp.float32(off_value))


# ----------------------------------------------------------------------------
# Wrappers
# ----------------------------------------------------------------------------
def fused_two_head_linear(x, u, wo_t, bo, wr_t, br,
                          compute_dtype=jnp.bfloat16, out_dtype=jnp.float32):
    """One launch: (x @ wo_t + bo, u @ wr_t + br). Weights pre-(D,C), padded."""
    n_x, d = x.shape
    n_u, d_u = u.shape
    assert d == d_u
    co = wo_t.shape[1]
    cr = wr_t.shape[1]

    tm = _row_tile(max(n_x, n_u))
    steps_x = _cdiv(n_x, tm)
    steps_u = _cdiv(n_u, tm)
    nsteps = max(steps_x, steps_u)

    # The shorter head revisits its last real block (no new DMA) and its
    # compute is skipped via pl.when; trailing padded output tiles stay
    # uninitialized and are sliced off by the caller.
    x_map = ((lambda i: (i, 0)) if steps_x == nsteps
             else (lambda i: (jnp.minimum(i, steps_x - 1), 0)))
    u_map = ((lambda i: (i, 0)) if steps_u == nsteps
             else (lambda i: (jnp.minimum(i, steps_u - 1), 0)))
    rows_obj = n_x if steps_x == nsteps else nsteps * tm
    rows_rel = n_u if steps_u == nsteps else nsteps * tm

    kernel = functools.partial(_dual_head_kernel, steps_x=steps_x,
                               steps_u=steps_u, cdt=compute_dtype)

    obj_p, rel_p = pl.pallas_call(
        kernel,
        out_shape=(jax.ShapeDtypeStruct((rows_obj, co), out_dtype),
                   jax.ShapeDtypeStruct((rows_rel, cr), out_dtype)),
        grid=(nsteps,),
        in_specs=[
            pl.BlockSpec((tm, d), x_map),             # x tile (streamed f32)
            pl.BlockSpec((tm, d), u_map),             # u tile (streamed f32)
            pl.BlockSpec((d, co), lambda i: (0, 0)),  # W_obj (resident bf16)
            pl.BlockSpec((1, co), lambda i: (0, 0)),  # b_obj (resident f32)
            pl.BlockSpec((d, cr), lambda i: (0, 0)),  # W_rel (resident bf16)
            pl.BlockSpec((1, cr), lambda i: (0, 0)),  # b_rel (resident f32)
        ],
        out_specs=(
            pl.BlockSpec((tm, co), lambda i: (i, 0)),
            pl.BlockSpec((tm, cr), lambda i: (i, 0)),
        ),
        compiler_params=pltpu.CompilerParams(
            dimension_semantics=("parallel",),
            vmem_limit_bytes=_vmem_limit_bytes(tm, d, co + cr, n_streams=2),
        ),
    )(x, u, wo_t, bo, wr_t, br)
    return obj_p, rel_p


def single_head_linear(u, w_t, b, compute_dtype=jnp.bfloat16,
                       out_dtype=jnp.float32):
    """u @ w_t + b with w_t pre-(D, C_pad)."""
    n, d = u.shape
    c = w_t.shape[1]
    tm = _row_tile(n)
    nsteps = _cdiv(n, tm)

    out = pl.pallas_call(
        functools.partial(_single_head_kernel, cdt=compute_dtype),
        out_shape=jax.ShapeDtypeStruct((n, c), out_dtype),
        grid=(nsteps,),
        in_specs=[
            pl.BlockSpec((tm, d), lambda i: (i, 0)),
            pl.BlockSpec((d, c), lambda i: (0, 0)),
            pl.BlockSpec((1, c), lambda i: (0, 0)),
        ],
        out_specs=pl.BlockSpec((tm, c), lambda i: (i, 0)),
        compiler_params=pltpu.CompilerParams(
            dimension_semantics=("parallel",),
            vmem_limit_bytes=_vmem_limit_bytes(tm, d, c, n_streams=1),
        ),
    )(u, w_t, b)
    return out


def pallas_to_onehot(labels, num_classes, fill=1000.0):
    """SGG to_onehot: `fill` at label index, -fill elsewhere (lane-dense out)."""
    n = labels.shape[0]
    c_pad = _round_up(num_classes, _LANE)
    tm = _row_tile(n)
    nsteps = _cdiv(n, tm)
    lbl = labels.astype(jnp.int32).reshape(n, 1)

    out = pl.pallas_call(
        functools.partial(_onehot_kernel, on_value=fill, off_value=-fill),
        out_shape=jax.ShapeDtypeStruct((n, c_pad), jnp.float32),
        grid=(nsteps,),
        in_specs=[pl.BlockSpec((tm, 1), lambda i: (i, 0))],
        out_specs=pl.BlockSpec((tm, c_pad), lambda i: (i, 0)),
        compiler_params=pltpu.CompilerParams(
            dimension_semantics=("parallel",)),
    )(lbl)
    return out[:, :num_classes]


# ----------------------------------------------------------------------------
# Module
# ----------------------------------------------------------------------------
class UnionPairPallas:
    """JAX/Pallas re-implementation of UnionPair's forward pass."""

    def __init__(self, num_obj, num_rel, pooling_dim, mode="sgdet", key=None,
                 compute_dtype=jnp.bfloat16):
        self.num_obj = num_obj
        self.num_rel = num_rel
        self.pooling_dim = pooling_dim
        self.mode = mode
        self.compute_dtype = compute_dtype
        key = key if key is not None else jax.random.PRNGKey(0)
        k_ow, k_rw = jax.random.split(key, 2)

        # make_fc: kaiming_uniform(a=1) weight, zero bias (PyTorch (out, in) layout)
        def kaiming_uniform(k, out_f, in_f):
            bound = (3.0 / in_f) ** 0.5  # gain=1 for a=1
            return jax.random.uniform(k, (out_f, in_f), jnp.float32,
                                      minval=-bound, maxval=bound)

        self.obj_w = kaiming_uniform(k_ow, num_obj, pooling_dim)
        self.obj_b = jnp.zeros((num_obj,), jnp.float32)
        self.rel_w = kaiming_uniform(k_rw, num_rel, pooling_dim)
        self.rel_b = jnp.zeros((num_rel,), jnp.float32)

        # One-time prep: transpose to (D, C), pad C to a multiple of 128 lanes,
        # cast weights to the compute dtype (bias stays f32 for the epilogue).
        def prep(w, b):
            c, d = w.shape
            c_pad = _round_up(c, _LANE)
            w_t = jnp.pad(w.T, ((0, 0), (0, c_pad - c))).astype(compute_dtype)
            b_p = jnp.pad(b, (0, c_pad - c)).reshape(1, c_pad).astype(jnp.float32)
            return w_t, b_p

        self._obj_wt, self._obj_bp = prep(self.obj_w, self.obj_b)
        self._rel_wt, self._rel_bp = prep(self.rel_w, self.rel_b)

    def __call__(self, x, union_features, obj_labels=None):
        # TODO(synk): gathering proposal.get_field('labels') from BoxList
        # proposals is host-side bookkeeping; pass the concatenated labels in.
        if self.mode == "predcls":
            assert obj_labels is not None
            obj_dists = pallas_to_onehot(obj_labels, self.num_obj)
            rel_p = single_head_linear(union_features, self._rel_wt,
                                       self._rel_bp, self.compute_dtype)
            rel_dists = rel_p[:, :self.num_rel]
        else:
            obj_p, rel_p = fused_two_head_linear(
                x, union_features,
                self._obj_wt, self._obj_bp,
                self._rel_wt, self._rel_bp,
                self.compute_dtype)
            # single fused slice per head (rows + classes)
            obj_dists = obj_p[:x.shape[0], :self.num_obj]
            rel_dists = rel_p[:union_features.shape[0], :self.num_rel]
        return obj_dists, rel_dists


# ----------------------------------------------------------------------------
# Demo / self-check
# ----------------------------------------------------------------------------
if __name__ == "__main__":
    key = jax.random.PRNGKey(0)
    k_x, k_u, k_l, k_p = jax.random.split(key, 4)

    pooling_dim = 128   # CONTEXT_POOLING_DIM (small synthetic)
    num_obj = 32
    num_rel = 16
    n_objs = 16         # total objects across proposals
    n_rels = 24         # total union (pair) features  (n_rels > n_objs path)

    x = jax.random.normal(k_x, (n_objs, pooling_dim), jnp.float32)
    union_features = jax.random.normal(k_u, (n_rels, pooling_dim), jnp.float32)
    obj_labels = jax.random.randint(k_l, (n_objs,), 0, num_obj, jnp.int32)

    # sgdet/sgcls path: fused dual-head Pallas matmul kernel (obj head gated)
    model = UnionPairPallas(num_obj, num_rel, pooling_dim, mode="sgdet", key=k_p)
    obj_dists, rel_dists = model(x, union_features)
    jax.block_until_ready((obj_dists, rel_dists))

    # predcls path: one-hot obj_dists (Pallas) + single-head Pallas rel head
    model_pc = UnionPairPallas(num_obj, num_rel, pooling_dim, mode="predcls", key=k_p)
    obj_dists_pc, rel_dists_pc = model_pc(x, union_features, obj_labels=obj_labels)
    jax.block_until_ready((obj_dists_pc, rel_dists_pc))

    # reference checks in plain JAX (emulate bf16 inputs, f32 accumulate)
    def bf(a):
        return a.astype(jnp.bfloat16).astype(jnp.float32)

    ref_obj = bf(x) @ bf(model.obj_w).T + model.obj_b
    ref_rel = bf(union_features) @ bf(model.rel_w).T + model.rel_b
    assert obj_dists.shape == (n_objs, num_obj)
    assert rel_dists.shape == (n_rels, num_rel)
    assert jnp.allclose(obj_dists, ref_obj, atol=1e-3, rtol=1e-3), "obj_fc mismatch"
    assert jnp.allclose(rel_dists, ref_rel, atol=1e-3, rtol=1e-3), "rel_fc mismatch"
    assert jnp.allclose(rel_dists_pc, ref_rel, atol=1e-3, rtol=1e-3), "rel_fc (predcls) mismatch"
    ref_oh = jnp.where(
        jax.nn.one_hot(obj_labels, num_obj, dtype=jnp.float32) > 0, 1000.0, -1000.0)
    assert jnp.allclose(obj_dists_pc, ref_oh), "to_onehot mismatch"

    print("KERNEL_OK")
</pallas_src>

<mosaic_0001>
module attributes {stable_mosaic.version = 11 : i64} {
  func.func @_dual_head_kernel(%arg0: i32, %arg1: memref<16x128xf32, #tpu.memory_space<vmem>>, %arg2: memref<16x128xf32, #tpu.memory_space<vmem>>, %arg3: memref<128x128xbf16, #tpu.memory_space<vmem>>, %arg4: memref<1x128xf32, #tpu.memory_space<vmem>>, %arg5: memref<128x128xbf16, #tpu.memory_space<vmem>>, %arg6: memref<1x128xf32, #tpu.memory_space<vmem>>, %arg7: memref<16x128xf32, #tpu.memory_space<vmem>>, %arg8: memref<16x128xf32, #tpu.memory_space<vmem>>) attributes {dimension_semantics = [#tpu.dimension_semantics<parallel>], iteration_bounds = array<i64: 2>, scalar_prefetch = 0 : i64, scratch_operands = 0 : i64, tpu.core_type = #tpu.core_type<tc>, window_params = [{transform_indices = @transform_0, window_bounds = array<i64: 16, 128>}, {transform_indices = @transform_1, window_bounds = array<i64: 16, 128>}, {pipeline_mode = #tpu.pipeline_mode<synchronous>, transform_indices = @transform_2, window_bounds = array<i64: 128, 128>}, {pipeline_mode = #tpu.pipeline_mode<synchronous>, transform_indices = @transform_3, window_bounds = array<i64: 1, 128>}, {pipeline_mode = #tpu.pipeline_mode<synchronous>, transform_indices = @transform_4, window_bounds = array<i64: 128, 128>}, {pipeline_mode = #tpu.pipeline_mode<synchronous>, transform_indices = @transform_5, window_bounds = array<i64: 1, 128>}, {transform_indices = @transform_6, window_bounds = array<i64: 16, 128>}, {transform_indices = @transform_7, window_bounds = array<i64: 16, 128>}]} {
    %c1_i32 = arith.constant 1 : i32
    %0 = arith.cmpi slt, %arg0, %c1_i32 : i32
    %1 = arith.extui %0 : i1 to i32
    %c0_i32 = arith.constant 0 : i32
    %2 = arith.cmpi ne, %1, %c0_i32 : i32
    scf.if %2 {
      %c0 = arith.constant 0 : index
      %c0_1 = arith.constant 0 : index
      %6 = vector.load %arg1[%c0, %c0_1] : memref<16x128xf32, #tpu.memory_space<vmem>>, vector<16x128xf32>
      %7 = arith.truncf %6 : vector<16x128xf32> to vector<16x128xbf16>
      %c0_2 = arith.constant 0 : index
      %c0_3 = arith.constant 0 : index
      %8 = vector.load %arg3[%c0_2, %c0_3] : memref<128x128xbf16, #tpu.memory_space<vmem>>, vector<128x128xbf16>
      %cst = arith.constant dense<0.000000e+00> : vector<16x128xf32>
      %9 = tpu.matmul %7, %8, %cst {dimension_numbers = #tpu.dot_dimension_numbers<[1], [0], [0], [1], [0, 0, 1, 1], [], []>} : vector<16x128xbf16>, vector<128x128xbf16>, vector<16x128xf32> -> vector<16x128xf32>
      %c0_4 = arith.constant 0 : index
      %c0_5 = arith.constant 0 : index
      %10 = vector.load %arg4[%c0_4, %c0_5] : memref<1x128xf32, #tpu.memory_space<vmem>>, vector<1x128xf32>
      %11 = vector.broadcast %10 : vector<1x128xf32> to vector<16x128xf32>
      %12 = arith.addf %9, %11 : vector<16x128xf32>
      %c0_6 = arith.constant 0 : index
      %c0_7 = arith.constant 0 : index
      %13 = vector.load %arg7[%c0_6, %c0_7] : memref<16x128xf32, #tpu.memory_space<vmem>>, vector<16x128xf32>
      tpu.vector_store %arg7[%c0_6, %c0_7], %12 {strides = array<i32>} : memref<16x128xf32, #tpu.memory_space<vmem>>, vector<16x128xf32>,
    } else {
    }
    %c2_i32 = arith.constant 2 : i32
    %3 = arith.cmpi slt, %arg0, %c2_i32 : i32
    %4 = arith.extui %3 : i1 to i32
    %c0_i32_0 = arith.constant 0 : i32
    %5 = arith.cmpi ne, %4, %c0_i32_0 : i32
    scf.if %5 {
      %c0 = arith.constant 0 : index
      %c0_1 = arith.constant 0 : index
      %6 = vector.load %arg2[%c0, %c0_1] : memref<16x128xf32, #tpu.memory_space<vmem>>, vector<16x128xf32>
      %7 = arith.truncf %6 : vector<16x128xf32> to vector<16x128xbf16>
      %c0_2 = arith.constant 0 : index
      %c0_3 = arith.constant 0 : index
      %8 = vector.load %arg5[%c0_2, %c0_3] : memref<128x128xbf16, #tpu.memory_space<vmem>>, vector<128x128xbf16>
      %cst = arith.constant dense<0.000000e+00> : vector<16x128xf32>
      %9 = tpu.matmul %7, %8, %cst {dimension_numbers = #tpu.dot_dimension_numbers<[1], [0], [0], [1], [0, 0, 1, 1], [], []>} : vector<16x128xbf16>, vector<128x128xbf16>, vector<16x128xf32> -> vector<16x128xf32>
      %c0_4 = arith.constant 0 : index
      %c0_5 = arith.constant 0 : index
      %10 = vector.load %arg6[%c0_4, %c0_5] : memref<1x128xf32, #tpu.memory_space<vmem>>, vector<1x128xf32>
      %11 = vector.broadcast %10 : vector<1x128xf32> to vector<16x128xf32>
      %12 = arith.addf %9, %11 : vector<16x128xf32>
      %c0_6 = arith.constant 0 : index
      %c0_7 = arith.constant 0 : index
      %13 = vector.load %arg8[%c0_6, %c0_7] : memref<16x128xf32, #tpu.memory_space<vmem>>, vector<16x128xf32>
      tpu.vector_store %arg8[%c0_6, %c0_7], %12 {strides = array<i32>} : memref<16x128xf32, #tpu.memory_space<vmem>>, vector<16x128xf32>,
    } else {
    }
    return
  }
  func.func @transform_0(%arg0: i32) -> (i32, i32) {
    %c0_i32 = arith.constant 0 : i32
    %0 = arith.minsi %arg0, %c0_i32 : i32
    %c0_i32_0 = arith.constant 0 : i32
    %c0_i32_1 = arith.constant 0 : i32
    return %0, %c0_i32_0 : i32, i32
  }
  func.func @transform_1(%arg0: i32) -> (i32, i32) {
    %c0_i32 = arith.constant 0 : i32
    %c0_i32_0 = arith.constant 0 : i32
    return %arg0, %c0_i32 : i32, i32
  }
  func.func @transform_2(%arg0: i32) -> (i32, i32) {
    %c0_i32 = arith.constant 0 : i32
    %c0_i32_0 = arith.constant 0 : i32
    %c0_i32_1 = arith.constant 0 : i32
    return %c0_i32, %c0_i32_0 : i32, i32
  }
  func.func @transform_3(%arg0: i32) -> (i32, i32) {
    %c0_i32 = arith.constant 0 : i32
    %c0_i32_0 = arith.constant 0 : i32
    %c0_i32_1 = arith.constant 0 : i32
    return %c0_i32, %c0_i32_0 : i32, i32
  }
  func.func @transform_4(%arg0: i32) -> (i32, i32) {
    %c0_i32 = arith.constant 0 : i32
    %c0_i32_0 = arith.constant 0 : i32
    %c0_i32_1 = arith.constant 0 : i32
    return %c0_i32, %c0_i32_0 : i32, i32
  }
  func.func @transform_5(%arg0: i32) -> (i32, i32) {
    %c0_i32 = arith.constant 0 : i32
    %c0_i32_0 = arith.constant 0 : i32
    %c0_i32_1 = arith.constant 0 : i32
    return %c0_i32, %c0_i32_0 : i32, i32
  }
  func.func @transform_6(%arg0: i32) -> (i32, i32) {
    %c0_i32 = arith.constant 0 : i32
    %c0_i32_0 = arith.constant 0 : i32
    return %arg0, %c0_i32 : i32, i32
  }
  func.func @transform_7(%arg0: i32) -> (i32, i32) {
    %c0_i32 = arith.constant 0 : i32
    %c0_i32_0 = arith.constant 0 : i32
    return %arg0, %c0_i32 : i32, i32
  }
}

</mosaic_0001>

<llo_original>
// kernel: tpu_custom_call.1
$region0: #{tpu_custom_call.1}
  #allocation0 [shape = 'u32[]', space=smem, size = 0x4, offset = 0x4, fixed_abs, tag = 'smem constant byte address 0x4 - core index']
  #allocation1 [shape = 'u32[144,128]{1,0:T(1,128)}', space=vmem, size = 0x12000, scoped, tag = 'internal scratch']
  %s0 = inlined_call_operand.hbm [shape: f32[16,128], index: 0, kind: input, shape index: {}]
  %s1 = inlined_call_operand.hbm [shape: f32[24,128], index: 1, kind: input, shape index: {}]
  %s2 = inlined_call_operand.hbm [shape: bf16[128,128], index: 2, kind: input, shape index: {}]
  %s3 = inlined_call_operand.vmem [shape: f32[1,128], index: 3, kind: input, shape index: {}]
  %s4 = inlined_call_operand.hbm [shape: bf16[128,128], index: 4, kind: input, shape index: {}]
  %s5 = inlined_call_operand.vmem [shape: f32[1,128], index: 5, kind: input, shape index: {}]
  %s6 = inlined_call_operand.hbm [shape: f32[32,128], index: 6, kind: output, shape index: {0}]
  %s7 = inlined_call_operand.hbm [shape: f32[24,128], index: 7, kind: output, shape index: {1}]
  %8 = xla_tuple %s6, %s7
  %s9 = sld [smem:[#allocation0]]
  $region89: #{tpu_custom_call.1} parent=0
    _
  %s11 = ssub.s32 1, %s9
  %s12 = scalar_select 0, %s11, %s9
  $region1: #{tpu_custom_call.1} parent=0
    #allocation2 [shape = 'u8[16384]{0}', space=vmem, size = 0x4000, scoped, tag = 'input window, operand 0']
    #allocation3 [shape = 's32[2]{0}', space=sflag, size = 0x8, scoped, tag = 'scoped memory for tpu_custom_call.1']
    #allocation4 [shape = 's32[2]{0}', space=sflag, size = 0x8, scoped, tag = 'scoped memory for tpu_custom_call.1']
    #allocation5 [shape = 'u8[16384]{0}', space=vmem, size = 0x4000, scoped, tag = 'input window, operand 1']
    #allocation6 [shape = 's32[2]{0}', space=sflag, size = 0x8, scoped, tag = 'scoped memory for tpu_custom_call.1']
    #allocation7 [shape = 'u8[32768]{0}', space=vmem, size = 0x8000, scoped, tag = 'input window, operand 2, single buffered']
    #allocation8 [shape = 'u8[32768]{0}', space=vmem, size = 0x8000, scoped, tag = 'input window, operand 4, single buffered']
    #allocation9 [shape = 's32[1]{0}', space=sflag, size = 0x4, scoped, tag = 'scoped memory for tpu_custom_call.1']
    #allocation10 [shape = 'u8[16384]{0}', space=vmem, size = 0x4000, scoped, tag = 'output window, operand 0']
    #allocation11 [shape = 'u8[16384]{0}', space=vmem, size = 0x4000, scoped, tag = 'output window, operand 1']
    #allocation12 [shape = 's32[2]{0}', space=sflag, size = 0x8, scoped, tag = 'scoped memory for tpu_custom_call.1']
    %13 = vsyncpa [#allocation3], 0
    %s14 = scalar_lea.sflag [#allocation3], 1
    %15 = vsyncpa %s14, 0
    %16 = vsyncpa [#allocation6], 0
    %s17 = scalar_lea.sflag [#allocation6], 1
    %18 = vsyncpa %s17, 0
    %19 = vsyncpa [#allocation9], 0
    %20 = vsyncpa [#allocation4], 0
    %s21 = scalar_lea.sflag [#allocation4], 1
    %22 = vsyncpa %s21, 0
    %23 = vsyncpa [#allocation12], 0
    %s24 = scalar_lea.sflag [#allocation12], 1
    %25 = vsyncpa %s24, 0
    loop: start=0, step=1, limit=4
    $region2: #{tpu_custom_call.1} parent=1 // loop_pre_header
      _
    $region3: #{tpu_custom_call.1} parent=1 // loop_header
      %s27 = sphi 0, %s31
      %p28 = scmp.ge.s32.totalorder %s27, 4
      %s41 = sphi 0, %s43
      %s44 = sphi 0, %s41
      %s45 = sphi 0, %s44
      %s61 = sphi 0, %s45
      %s67 = sphi 0, %s69
      %s70 = sphi 0, %s67
      %s71 = sphi 0, %s70
      %s87 = sphi 0, %s71
      %s91 = sphi 0, %s91
      %s93 = sphi 0, %s91
      %s94 = sphi 0, %s93
      %s108 = sphi 0, %s94
      %s112 = sphi 0, %s112
      %s114 = sphi 0, %s112
      %s115 = sphi 0, %s114
      %s129 = sphi 0, %s115
      %s133 = sphi 0, %s133
      %s135 = sphi 0, %s133
      %s136 = sphi 0, %s135
      %s150 = sphi 0, %s136
      %s154 = sphi 0, %s154
      %s156 = sphi 0, %s154
      %s157 = sphi 0, %s156
      %s171 = sphi 0, %s157
      %s177 = sphi 0, %s179
      %s180 = sphi 0, %s177
      %s181 = sphi 0, %s180
      %s197 = sphi 0, %s181
      %s203 = sphi 0, %s205
      %s206 = sphi 0, %s203
      %s207 = sphi 0, %s206
      %s223 = sphi 0, %s207
    $region4: #{tpu_custom_call.1} parent=1 // loop_header_branch
      %30 = sbr.rel (%p28) target = $region8
    $region5: #{tpu_custom_call.1} parent=1 // loop_body
      %s32 = ssub.s32 %s27, 1
      %s33 = ssub.s32 %s27, 2
      %s34 = sadd.s32 %s27, 1
      %p35 = scmp.lt.s32.totalorder %s27, 0
      %s36 = scalar_select %p35, %s27, 0
      %p37 = scmp.lt.s32.totalorder %s34, 0
      %s38 = scalar_select %p37, %s34, 0
      %s39 = ssub.s32 %s36, %s38
      %p40 = scmp.eq.s32.totalorder %s39, 0
      %s42 = sadd.s32 %s41, 1
      %s43 = scalar_select %p40, %s41, %s42
      %p46 = pneg %p40
      %p47 = scmp.eq.s32.totalorder %s27, 1
      %p48 = por %p46, %p47
      %p49 = scmp.ne.s32.totalorder %s41, %s44
      %p50 = scmp.eq.s32.totalorder %s27, 0
      %p51 = por %p49, %p50
      %p52 = scmp.ne.s32.totalorder %s41, %s44
      %p53 = scmp.eq.s32.totalorder %s32, 1
      %p54 = por %p52, %p53
      %p55 = scmp.ne.s32.totalorder %s44, %s45
      %p56 = scmp.eq.s32.totalorder %s32, 0
      %p57 = por %p55, %p56
      %p58 = scmp.ne.s32.totalorder %s44, %s45
      %p59 = scmp.eq.s32.totalorder %s33, 1
      %p60 = por %p58, %p59
      %p62 = scmp.ne.s32.totalorder %s45, %s61
      %p63 = scmp.eq.s32.totalorder %s33, 0
      %p64 = por %p62, %p63
      %s65 = ssub.s32 %s27, %s34
      %p66 = scmp.eq.s32.totalorder %s65, 0
      %s68 = sadd.s32 %s67, 1
      %s69 = scalar_select %p66, %s67, %s68
      %p72 = pneg %p66
      %p73 = scmp.eq.s32.totalorder %s27, 1
      %p74 = por %p72, %p73
      %p75 = scmp.ne.s32.totalorder %s67, %s70
      %p76 = scmp.eq.s32.totalorder %s27, 0
      %p77 = por %p75, %p76
      %p78 = scmp.ne.s32.totalorder %s67, %s70
      %p79 = scmp.eq.s32.totalorder %s32, 1
      %p80 = por %p78, %p79
      %p81 = scmp.ne.s32.totalorder %s70, %s71
      %p82 = scmp.eq.s32.totalorder %s32, 0
      %p83 = por %p81, %p82
      %p84 = scmp.ne.s32.totalorder %s70, %s71
      %p85 = scmp.eq.s32.totalorder %s33, 1
      %p86 = por %p84, %p85
      %p88 = scmp.ne.s32.totalorder %s71, %s87
      %p89 = scmp.eq.s32.totalorder %s33, 0
      %p90 = por %p88, %p89
      %s92 = sadd.s32 %s91, 1
      %p95 = scmp.eq.s32.totalorder %s27, 1
      %p96 = scmp.ne.s32.totalorder %s91, %s93
      %p97 = scmp.eq.s32.totalorder %s27, 0
      %p98 = por %p96, %p97
      %p99 = scmp.ne.s32.totalorder %s91, %s93
      %p100 = scmp.eq.s32.totalorder %s32, 1
      %p101 = por %p99, %p100
      %p102 = scmp.ne.s32.totalorder %s93, %s94
      %p103 = scmp.eq.s32.totalorder %s32, 0
      %p104 = por %p102, %p103
      %p105 = scmp.ne.s32.totalorder %s93, %s94
      %p106 = scmp.eq.s32.totalorder %s33, 1
      %p107 = por %p105, %p106
      %p109 = scmp.ne.s32.totalorder %s94, %s108
      %p110 = scmp.eq.s32.totalorder %s33, 0
      %p111 = por %p109, %p110
      %s113 = sadd.s32 %s112, 1
      %p116 = scmp.eq.s32.totalorder %s27, 1
      %p117 = scmp.ne.s32.totalorder %s112, %s114
      %p118 = scmp.eq.s32.totalorder %s27, 0
      %p119 = por %p117, %p118
      %p120 = scmp.ne.s32.totalorder %s112, %s114
      %p121 = scmp.eq.s32.totalorder %s32, 1
      %p122 = por %p120, %p121
      %p123 = scmp.ne.s32.totalorder %s114, %s115
      %p124 = scmp.eq.s32.totalorder %s32, 0
      %p125 = por %p123, %p124
      %p126 = scmp.ne.s32.totalorder %s114, %s115
      %p127 = scmp.eq.s32.totalorder %s33, 1
      %p128 = por %p126, %p127
      %p130 = scmp.ne.s32.totalorder %s115, %s129
      %p131 = scmp.eq.s32.totalorder %s33, 0
      %p132 = por %p130, %p131
      %s134 = sadd.s32 %s133, 1
      %p137 = scmp.eq.s32.totalorder %s27, 1
      %p138 = scmp.ne.s32.totalorder %s133, %s135
      %p139 = scmp.eq.s32.totalorder %s27, 0
      %p140 = por %p138, %p139
      %p141 = scmp.ne.s32.totalorder %s133, %s135
      %p142 = scmp.eq.s32.totalorder %s32, 1
      %p143 = por %p141, %p142
      %p144 = scmp.ne.s32.totalorder %s135, %s136
      %p145 = scmp.eq.s32.totalorder %s32, 0
      %p146 = por %p144, %p145
      %p147 = scmp.ne.s32.totalorder %s135, %s136
      %p148 = scmp.eq.s32.totalorder %s33, 1
      %p149 = por %p147, %p148
      %p151 = scmp.ne.s32.totalorder %s136, %s150
      %p152 = scmp.eq.s32.totalorder %s33, 0
      %p153 = por %p151, %p152
      %s155 = sadd.s32 %s154, 1
      %p158 = scmp.eq.s32.totalorder %s27, 1
      %p159 = scmp.ne.s32.totalorder %s154, %s156
      %p160 = scmp.eq.s32.totalorder %s27, 0
      %p161 = por %p159, %p160
      %p162 = scmp.ne.s32.totalorder %s154, %s156
      %p163 = scmp.eq.s32.totalorder %s32, 1
      %p164 = por %p162, %p163
      %p165 = scmp.ne.s32.totalorder %s156, %s157
      %p166 = scmp.eq.s32.totalorder %s32, 0
      %p167 = por %p165, %p166
      %p168 = scmp.ne.s32.totalorder %s156, %s157
      %p169 = scmp.eq.s32.totalorder %s33, 1
      %p170 = por %p168, %p169
      %p172 = scmp.ne.s32.totalorder %s157, %s171
      %p173 = scmp.eq.s32.totalorder %s33, 0
      %p174 = por %p172, %p173
      %s175 = ssub.s32 %s27, %s34
      %p176 = scmp.eq.s32.totalorder %s175, 0
      %s178 = sadd.s32 %s177, 1
      %s179 = scalar_select %p176, %s177, %s178
      %p182 = pneg %p176
      %p183 = scmp.eq.s32.totalorder %s27, 1
      %p184 = por %p182, %p183
      %p185 = scmp.ne.s32.totalorder %s177, %s180
      %p186 = scmp.eq.s32.totalorder %s27, 0
      %p187 = por %p185, %p186
      %p188 = scmp.ne.s32.totalorder %s177, %s180
      %p189 = scmp.eq.s32.totalorder %s32, 1
      %p190 = por %p188, %p189
      %p191 = scmp.ne.s32.totalorder %s180, %s181
      %p192 = scmp.eq.s32.totalorder %s32, 0
      %p193 = por %p191, %p192
      %p194 = scmp.ne.s32.totalorder %s180, %s181
      %p195 = scmp.eq.s32.totalorder %s33, 1
      %p196 = por %p194, %p195
      %p198 = scmp.ne.s32.totalorder %s181, %s197
      %p199 = scmp.eq.s32.totalorder %s33, 0
      %p200 = por %p198, %p199
      %s201 = ssub.s32 %s27, %s34
      %p202 = scmp.eq.s32.totalorder %s201, 0
      %s204 = sadd.s32 %s203, 1
      %s205 = scalar_select %p202, %s203, %s204
      %p208 = pneg %p202
      %p209 = scmp.eq.s32.totalorder %s27, 1
      %p210 = por %p208, %p209
      %p211 = scmp.ne.s32.totalorder %s203, %s206
      %p212 = scmp.eq.s32.totalorder %s27, 0
      %p213 = por %p211, %p212
      %p214 = scmp.ne.s32.totalorder %s203, %s206
      %p215 = scmp.eq.s32.totalorder %s32, 1
      %p216 = por %p214, %p215
      %p217 = scmp.ne.s32.totalorder %s206, %s207
      %p218 = scmp.eq.s32.totalorder %s32, 0
      %p219 = por %p217, %p218
      %p220 = scmp.ne.s32.totalorder %s206, %s207
      %p221 = scmp.eq.s32.totalorder %s33, 1
      %p222 = por %p220, %p221
      %p224 = scmp.ne.s32.totalorder %s207, %s223
      %p225 = scmp.eq.s32.totalorder %s33, 0
      %p226 = por %p224, %p225
      %p227 = scmp.le.s32.totalorder 1, %s27
      %p228 = scmp.lt.s32.totalorder %s27, 3
      %p229 = pnand %p227, %p228
      %p230 = pneg %p229
      // Predicated region
      $region9: #{tpu_custom_call.1} parent=5 // pred_check
        _
      $region10: #{tpu_custom_call.1} parent=5 // pred_check_branch
        %232 = sbr.rel (%p229) target = $region12
      $region11: #{tpu_custom_call.1} parent=5 // pred_region
        %s233 = ssub.s32 %s27, 1
        // Predicated region
        $region13: #{tpu_custom_call.1} parent=11 // pred_check
          %p234 = pneg %p104
        $region14: #{tpu_custom_call.1} parent=11 // pred_check_branch
          %236 = sbr.rel (%p234) target = $region16
        $region15: #{tpu_custom_call.1} parent=11 // pred_region
          %s238 = ssub.s32 1024, 1024
          %239 = vsyncadd [#allocation6], %s238
          %s240 = sshll.u32 [#allocation7], 4
          %s241 = int_to_ptr.vmem [resolvable:$true] %s240
          %246 = dma.hbm_to_vmem [thread:$0]  %s2, 1024, %s241, [#allocation6], 64, 64, 4
        $region16: #{tpu_custom_call.1} parent=11 // pred_fallthru
          _
        // Predicated region
        $region17: #{tpu_custom_call.1} parent=11 // pred_check
          %p247 = pneg %p125
        $region18: #{tpu_custom_call.1} parent=11 // pred_check_branch
          %249 = sbr.rel (%p247) target = $region20
        $region19: #{tpu_custom_call.1} parent=11 // pred_region
          _
        $region20: #{tpu_custom_call.1} parent=11 // pred_fallthru
          _
        // Predicated region
        $region21: #{tpu_custom_call.1} parent=11 // pred_check
          %p250 = pneg %p146
        $region22: #{tpu_custom_call.1} parent=11 // pred_check_branch
          %252 = sbr.rel (%p250) target = $region24
        $region23: #{tpu_custom_call.1} parent=11 // pred_region
          %s254 = ssub.s32 1024, 1024
          %255 = vsyncadd [#allocation9], %s254
          %s256 = sshll.u32 [#allocation8], 4
          %s257 = int_to_ptr.vmem [resolvable:$true] %s256
          %262 = dma.hbm_to_vmem [thread:$0]  %s4, 1024, %s257, [#allocation9], 64, 64, 4
        $region24: #{tpu_custom_call.1} parent=11 // pred_fallthru
          _
        // Predicated region
        $region25: #{tpu_custom_call.1} parent=11 // pred_check
          %p263 = pneg %p167
        $region26: #{tpu_custom_call.1} parent=11 // pred_check_branch
          %265 = sbr.rel (%p263) target = $region28
        $region27: #{tpu_custom_call.1} parent=11 // pred_region
          _
        $region28: #{tpu_custom_call.1} parent=11 // pred_fallthru
          _
      $region12: #{tpu_custom_call.1} parent=5 // pred_fallthru
        _
      %p266 = scmp.lt.s32.totalorder %s27, 2
      // Predicated region
      $region29: #{tpu_custom_call.1} parent=5 // pred_check
        %p267 = pneg %p266
      $region30: #{tpu_custom_call.1} parent=5 // pred_check_branch
        %269 = sbr.rel (%p267) target = $region32
      $region31: #{tpu_custom_call.1} parent=5 // pred_region
        // Predicated region
        $region33: #{tpu_custom_call.1} parent=31 // pred_check
          %p270 = pneg %p51
        $region34: #{tpu_custom_call.1} parent=31 // pred_check_branch
          %272 = sbr.rel (%p270) target = $region36
        $region35: #{tpu_custom_call.1} parent=31 // pred_region
          %s273 = sand.u32 %s41, 1
          %s274 = scalar_lea.sflag [#allocation3], %s273
          %s275 = sand.u32 %s41, 1
          %s276 = smul.addr %s275, 16
          %s277 = scalar_lea.vmem [#allocation2], %s276
          %p278 = scmp.lt.s32.totalorder %s27, 0
          %s279 = scalar_select %p278, %s27, 0
          %s280 = smul.u32 2, %s279
          %s282 = ssub.s32 256, 256
          %283 = vsyncadd %s274, %s282
          %s284 = smul.addr %s280, 128
          %s285 = scalar_lea.hbm %s0, %s284
          %s286 = sshll.u32 %s277, 4
          %s287 = int_to_ptr.vmem [resolvable:$true] %s286
          %292 = dma.hbm_to_vmem [thread:$0]  %s285, 256, %s287, %s274, 128, 128, 8
        $region36: #{tpu_custom_call.1} parent=31 // pred_fallthru
          _
        // Predicated region
        $region37: #{tpu_custom_call.1} parent=31 // pred_check
          %p293 = pneg %p77
        $region38: #{tpu_custom_call.1} parent=31 // pred_check_branch
          %295 = sbr.rel (%p293) target = $region40
        $region39: #{tpu_custom_call.1} parent=31 // pred_region
          %s296 = sand.u32 %s27, 1
          %s297 = scalar_lea.sflag [#allocation6], %s296
          %s298 = sand.u32 %s67, 1
          %s299 = smul.addr %s298, 16
          %s300 = scalar_lea.vmem [#allocation5], %s299
          %s301 = smul.u32 2, %s27
          %s302 = ssub.s32 3, %s301
          %p303 = scmp.lt.s32.totalorder %s302, 2
          %s304 = scalar_select %p303, %s302, 2
          %s305 = smul.u32 128, %s304
          %s307 = ssub.s32 256, %s305
          %308 = vsyncadd %s297, %s307
          %p309 = scmp.ne.s32.totalorder 0, %s305
          %s310 = smul.addr %s301, 128
          %s311 = scalar_lea.hbm %s1, %s310
          %s312 = smul.u32 8, %s304
          %s313 = sshll.u32 %s300, 4
          %s314 = int_to_ptr.vmem [resolvable:$true] %s313
          %s315 = sshll.u32 %s312, 4
          %319 = dma.hbm_to_vmem [thread:$0]  (%p309), %s311, %s315, %s314, %s297, 128, 128, 8
        $region40: #{tpu_custom_call.1} parent=31 // pred_fallthru
          _
      $region32: #{tpu_custom_call.1} parent=5 // pred_fallthru
        _
      %p320 = scmp.le.s32.totalorder 1, %s27
      %p321 = scmp.lt.s32.totalorder %s27, 3
      %p322 = pnand %p320, %p321
      %p323 = pneg %p322
      // Predicated region
      $region41: #{tpu_custom_call.1} parent=5 // pred_check
        _
      $region42: #{tpu_custom_call.1} parent=5 // pred_check_branch
        %325 = sbr.rel (%p322) target = $region44
      $region43: #{tpu_custom_call.1} parent=5 // pred_region
        %s326 = ssub.s32 %s27, 1
        %s327 = sand.u32 %s44, 1
        %s328 = scalar_lea.sflag [#allocation3], %s327
        %s329 = sand.u32 %s44, 1
        %s330 = smul.addr %s329, 16
        %s331 = scalar_lea.vmem [#allocation2], %s330
        // Predicated region
        $region45: #{tpu_custom_call.1} parent=43 // pred_check
          %p332 = pneg %p57
        $region46: #{tpu_custom_call.1} parent=43 // pred_check_branch
          %334 = sbr.rel (%p332) target = $region48
        $region47: #{tpu_custom_call.1} parent=43 // pred_region
          %335 = dma.done %s328, 256
        $region48: #{tpu_custom_call.1} parent=43 // pred_fallthru
          _
        %s336 = sand.u32 %s32, 1
        %s337 = scalar_lea.sflag [#allocation6], %s336
        %s338 = sand.u32 %s70, 1
        %s339 = smul.addr %s338, 16
        %s340 = scalar_lea.vmem [#allocation5], %s339
        // Predicated region
        $region49: #{tpu_custom_call.1} parent=43 // pred_check
          %p341 = pneg %p83
        $region50: #{tpu_custom_call.1} parent=43 // pred_check_branch
          %343 = sbr.rel (%p341) target = $region52
        $region51: #{tpu_custom_call.1} parent=43 // pred_region
          %344 = dma.done %s337, 256
        $region52: #{tpu_custom_call.1} parent=43 // pred_fallthru
          _
        // Predicated region
        $region53: #{tpu_custom_call.1} parent=43 // pred_check
          %p345 = pneg %p104
        $region54: #{tpu_custom_call.1} parent=43 // pred_check_branch
          %347 = sbr.rel (%p345) target = $region56
        $region55: #{tpu_custom_call.1} parent=43 // pred_region
          %348 = dma.done [#allocation6], 1024
        $region56: #{tpu_custom_call.1} parent=43 // pred_fallthru
          _
        // Predicated region
        $region57: #{tpu_custom_call.1} parent=43 // pred_check
          %p349 = pneg %p146
        $region58: #{tpu_custom_call.1} parent=43 // pred_check_branch
          %351 = sbr.rel (%p349) target = $region60
        $region59: #{tpu_custom_call.1} parent=43 // pred_region
          %352 = dma.done [#allocation9], 1024
        $region60: #{tpu_custom_call.1} parent=43 // pred_fallthru
          _
        %s353 = sand.u32 %s44, 1
        %s354 = scalar_lea.sflag [#allocation3], %s353
        %s355 = sand.u32 %s44, 1
        %s356 = smul.addr %s355, 16
        %s357 = scalar_lea.vmem [#allocation2], %s356
        %p358 = pneg %p57
        %p359 = pneg %p54
        %s360 = sand.u32 %s32, 1
        %s361 = scalar_lea.sflag [#allocation6], %s360
        %s362 = sand.u32 %s70, 1
        %s363 = smul.addr %s362, 16
        %s364 = scalar_lea.vmem [#allocation5], %s363
        %p365 = pneg %p83
        %p366 = pneg %p80
        %p367 = pneg %p104
        %p368 = pneg %p101
        %p369 = pneg %p125
        %p370 = pneg %p122
        %p371 = pneg %p146
        %p372 = pneg %p143
        %p373 = pneg %p167
        %p374 = pneg %p164
        %p375 = pneg %p193
        %p376 = pneg %p190
        %s377 = sand.u32 %s180, 1
        %s378 = scalar_lea.sflag [#allocation4], %s377
        %s379 = sand.u32 %s180, 1
        %s380 = smul.addr %s379, 16
        %s381 = scalar_lea.vmem [#allocation10], %s380
        %p382 = pneg %p219
        %p383 = pneg %p216
        %s384 = sand.u32 %s206, 1
        %s385 = scalar_lea.sflag [#allocation12], %s384
        %s386 = sand.u32 %s206, 1
        %s387 = smul.addr %s386, 16
        %s388 = scalar_lea.vmem [#allocation11], %s387
        %p389 = scmp.lt.s32.totalorder %s32, 0
        %s390 = scalar_select %p389, %s32, 0
        %s391 = smul.u32 2, %s390
        %s392 = smul.u32 2, %s32
        %s393 = ssub.s32 3, %s392
        %p394 = scmp.lt.s32.totalorder %s393, 2
        %s395 = scalar_select %p394, %s393, 2
        %s396 = smul.u32 128, %s395
        %s397 = smul.u32 2, %s32
        %s398 = smul.u32 2, %s32
        %s399 = ssub.s32 3, %s398
        %p400 = scmp.lt.s32.totalorder %s399, 2
        %s401 = scalar_select %p400, %s399, 2
        %s402 = smul.u32 128, %s401
        %p404 = scmp.lt.s32.totalorder %s32, 1
        // Predicated region
        $region61: #{tpu_custom_call.1} parent=43 // pred_check
          %p405 = pneg %p404
        $region62: #{tpu_custom_call.1} parent=43 // pred_check_branch
          %407 = sbr.rel (%p405) target = $region64
        $region63: #{tpu_custom_call.1} parent=43 // pred_region
          %v408 = vld [vmem:[%s331] sm:$0xff]
          %v409 = vld [vmem:[%s331 + $0x8] sm:$0xff]
          %v410 = vpack.c.bf16 %v409, %v408
          %v411 = vld [vmem:[#allocation7] sm:$0xf]
          %v412 = vld [vmem:[#allocation7 + $0x4] sm:$0xf]
          %v413 = vld [vmem:[#allocation7 + $0x8] sm:$0xf]
          %v414 = vld [vmem:[#allocation7 + $0xc] sm:$0xf]
          %v415 = vld [vmem:[#allocation7 + $0x10] sm:$0xf]
          %v416 = vld [vmem:[#allocation7 + $0x14] sm:$0xf]
          %v417 = vld [vmem:[#allocation7 + $0x18] sm:$0xf]
          %v418 = vld [vmem:[#allocation7 + $0x1c] sm:$0xf]
          %v419 = vld [vmem:[#allocation7 + $0x20] sm:$0xf]
          %v420 = vld [vmem:[#allocation7 + $0x24] sm:$0xf]
          %v421 = vld [vmem:[#allocation7 + $0x28] sm:$0xf]
          %v422 = vld [vmem:[#allocation7 + $0x2c] sm:$0xf]
          %v423 = vld [vmem:[#allocation7 + $0x30] sm:$0xf]
          %v424 = vld [vmem:[#allocation7 + $0x34] sm:$0xf]
          %v425 = vld [vmem:[#allocation7 + $0x38] sm:$0xf]
          %v426 = vld [vmem:[#allocation7 + $0x3c] sm:$0xf]
          %v427 = vld [vmem:[%s3] sm:$0x1]
          %v429 = vlaneseq
          %v430 = vshrl.u32 %v429, 7
          %v431 = vsub.s32 0, %v430
          %v432 = vrot.slane %v427, %v431
          %v450 = vunpack.c.l.b16 %v411
          %v451 = vunpack.c.l.b16 %v412
          %v452 = vunpack.c.l.b16 %v413
          %v453 = vunpack.c.l.b16 %v414
          %v454 = vunpack.c.l.b16 %v415
          %v455 = vunpack.c.l.b16 %v416
          %v456 = vunpack.c.l.b16 %v417
          %v457 = vunpack.c.l.b16 %v418
          %v458 = vunpack.c.l.b16 %v419
          %v459 = vunpack.c.l.b16 %v420
          %v460 = vunpack.c.l.b16 %v421
          %v461 = vunpack.c.l.b16 %v422
          %v462 = vunpack.c.l.b16 %v423
          %v463 = vunpack.c.l.b16 %v424
          %v464 = vunpack.c.l.b16 %v425
          %v465 = vunpack.c.l.b16 %v426
          %v466 = vpack.c.b16 %v451, %v450
          %v467 = vpack.c.b16 %v453, %v452
          %v468 = vpack.c.b16 %v455, %v454
          %v469 = vpack.c.b16 %v457, %v456
          %v470 = vpack.c.b16 %v459, %v458
          %v471 = vpack.c.b16 %v461, %v460
          %v472 = vpack.c.b16 %v463, %v462
          %v473 = vpack.c.b16 %v465, %v464
          %482 = vmatprep.subr.bf16.mxu0 0
          %483 = vmatpush1.bf16.msra.mxu0 %v473
          %484 = vmatprep.subr.bf16.mxu0 0
          %485 = vmatpush1.bf16.msra.mxu0 %v472
          %486 = vmatprep.subr.bf16.mxu0 0
          %487 = vmatpush1.bf16.msra.mxu0 %v471
          %488 = vmatprep.subr.bf16.mxu0 0
          %489 = vmatpush1.bf16.msra.mxu0 %v470
          %490 = vmatprep.subr.bf16.mxu0 0
          %491 = vmatpush1.bf16.msra.mxu0 %v469
          %492 = vmatprep.subr.bf16.mxu0 0
          %493 = vmatpush1.bf16.msra.mxu0 %v468
          %494 = vmatprep.subr.bf16.mxu0 0
          %495 = vmatpush1.bf16.msra.mxu0 %v467
          %496 = vmatprep.subr.bf16.mxu0 0
          %497 = vmatpush1.bf16.msra.mxu0 %v466
          %498 = vmatprep.subr.bf16.mxu0 0
          %499 = vmatpush2.bf16.msra.mxu0 0
          %500 = vmatprep.subr.bf16.mxu0 0
          %501 = vmatpush2.bf16.msra.mxu0 0
          %502 = vmatprep.subr.bf16.mxu0 0
          %503 = vmatpush2.bf16.msra.mxu0 0
          %504 = vmatprep.subr.bf16.mxu0 0
          %505 = vmatpush2.bf16.msra.mxu0 0
          %506 = vmatprep.subr.bf16.mxu0 0
          %507 = vmatpush2.bf16.msra.mxu0 0
          %508 = vmatprep.subr.bf16.mxu0 0
          %509 = vmatpush2.bf16.msra.mxu0 0
          %510 = vmatprep.subr.bf16.mxu0 0
          %511 = vmatpush2.bf16.msra.mxu0 0
          %512 = vmatprep.subr.bf16.mxu0 0
          %513 = vmatpush2.bf16.msra.mxu0 0
          %514 = vmatprep.mubr.bf16.mxu0 0
          %515 = vmatmul.mubr.bf16.gmra.mxu0 %v410
          %v516 = vpop.f32.mrf.mxu0
          %v517 = vadd.f32 %v432, %v516
          %v518 = vpop.f32.mrf.mxu0
          %v519 = vpop.f32.mrf.mxu0
          %v520 = vadd.f32 %v432, %v519
          %v521 = vpop.f32.mrf.mxu0
          %522 = vdwg.mxu0
          %523 = vst [vmem:[%s381] sm:$0xff] %v517
          %524 = vst [vmem:[%s381 + $0x8] sm:$0xff] %v520
        $region64: #{tpu_custom_call.1} parent=43 // pred_fallthru
          _
        %p525 = scmp.lt.s32.totalorder %s32, 2
        // Predicated region
        $region65: #{tpu_custom_call.1} parent=43 // pred_check
          %p526 = pneg %p525
        $region66: #{tpu_custom_call.1} parent=43 // pred_check_branch
          %528 = sbr.rel (%p526) target = $region68
        $region67: #{tpu_custom_call.1} parent=43 // pred_region
          %v529 = vld [vmem:[%s340] sm:$0xff]
          %v530 = vld [vmem:[%s340 + $0x8] sm:$0xff]
          %v531 = vpack.c.bf16 %v530, %v529
          %v532 = vld [vmem:[#allocation8] sm:$0xf]
          %v533 = vld [vmem:[#allocation8 + $0x4] sm:$0xf]
          %v534 = vld [vmem:[#allocation8 + $0x8] sm:$0xf]
          %v535 = vld [vmem:[#allocation8 + $0xc] sm:$0xf]
          %v536 = vld [vmem:[#allocation8 + $0x10] sm:$0xf]
          %v537 = vld [vmem:[#allocation8 + $0x14] sm:$0xf]
          %v538 = vld [vmem:[#allocation8 + $0x18] sm:$0xf]
          %v539 = vld [vmem:[#allocation8 + $0x1c] sm:$0xf]
          %v540 = vld [vmem:[#allocation8 + $0x20] sm:$0xf]
          %v541 = vld [vmem:[#allocation8 + $0x24] sm:$0xf]
          %v542 = vld [vmem:[#allocation8 + $0x28] sm:$0xf]
          %v543 = vld [vmem:[#allocation8 + $0x2c] sm:$0xf]
          %v544 = vld [vmem:[#allocation8 + $0x30] sm:$0xf]
          %v545 = vld [vmem:[#allocation8 + $0x34] sm:$0xf]
          %v546 = vld [vmem:[#allocation8 + $0x38] sm:$0xf]
          %v547 = vld [vmem:[#allocation8 + $0x3c] sm:$0xf]
          %v548 = vld [vmem:[%s5] sm:$0x1]
          %v550 = vlaneseq
          %v551 = vshrl.u32 %v550, 7
          %v552 = vsub.s32 0, %v551
          %v553 = vrot.slane %v548, %v552
          %v571 = vunpack.c.l.b16 %v532
          %v572 = vunpack.c.l.b16 %v533
          %v573 = vunpack.c.l.b16 %v534
          %v574 = vunpack.c.l.b16 %v535
          %v575 = vunpack.c.l.b16 %v536
          %v576 = vunpack.c.l.b16 %v537
          %v577 = vunpack.c.l.b16 %v538
          %v578 = vunpack.c.l.b16 %v539
          %v579 = vunpack.c.l.b16 %v540
          %v580 = vunpack.c.l.b16 %v541
          %v581 = vunpack.c.l.b16 %v542
          %v582 = vunpack.c.l.b16 %v543
          %v583 = vunpack.c.l.b16 %v544
          %v584 = vunpack.c.l.b16 %v545
          %v585 = vunpack.c.l.b16 %v546
          %v586 = vunpack.c.l.b16 %v547
          %v587 = vpack.c.b16 %v572, %v571
          %v588 = vpack.c.b16 %v574, %v573
          %v589 = vpack.c.b16 %v576, %v575
          %v590 = vpack.c.b16 %v578, %v577
          %v591 = vpack.c.b16 %v580, %v579
          %v592 = vpack.c.b16 %v582, %v581
          %v593 = vpack.c.b16 %v584, %v583
          %v594 = vpack.c.b16 %v586, %v585
          %603 = vmatprep.subr.bf16.mxu0 0
          %604 = vmatpush1.bf16.msra.mxu0 %v594
          %605 = vmatprep.subr.bf16.mxu0 0
          %606 = vmatpush1.bf16.msra.mxu0 %v593
          %607 = vmatprep.subr.bf16.mxu0 0
          %608 = vmatpush1.bf16.msra.mxu0 %v592
          %609 = vmatprep.subr.bf16.mxu0 0
          %610 = vmatpush1.bf16.msra.mxu0 %v591
          %611 = vmatprep.subr.bf16.mxu0 0
          %612 = vmatpush1.bf16.msra.mxu0 %v590
          %613 = vmatprep.subr.bf16.mxu0 0
          %614 = vmatpush1.bf16.msra.mxu0 %v589
          %615 = vmatprep.subr.bf16.mxu0 0
          %616 = vmatpush1.bf16.msra.mxu0 %v588
          %617 = vmatprep.subr.bf16.mxu0 0
          %618 = vmatpush1.bf16.msra.mxu0 %v587
          %619 = vmatprep.subr.bf16.mxu0 0
          %620 = vmatpush2.bf16.msra.mxu0 0
          %621 = vmatprep.subr.bf16.mxu0 0
          %622 = vmatpush2.bf16.msra.mxu0 0
          %623 = vmatprep.subr.bf16.mxu0 0
          %624 = vmatpush2.bf16.msra.mxu0 0
          %625 = vmatprep.subr.bf16.mxu0 0
          %626 = vmatpush2.bf16.msra.mxu0 0
          %627 = vmatprep.subr.bf16.mxu0 0
          %628 = vmatpush2.bf16.msra.mxu0 0
          %629 = vmatprep.subr.bf16.mxu0 0
          %630 = vmatpush2.bf16.msra.mxu0 0
          %631 = vmatprep.subr.bf16.mxu0 0
          %632 = vmatpush2.bf16.msra.mxu0 0
          %633 = vmatprep.subr.bf16.mxu0 0
          %634 = vmatpush2.bf16.msra.mxu0 0
          %635 = vmatprep.mubr.bf16.mxu0 0
          %636 = vmatmul.mubr.bf16.gmra.mxu0 %v531
          %v637 = vpop.f32.mrf.mxu0
          %v638 = vadd.f32 %v553, %v637
          %v639 = vpop.f32.mrf.mxu0
          %v640 = vpop.f32.mrf.mxu0
          %v641 = vadd.f32 %v553, %v640
          %v642 = vpop.f32.mrf.mxu0
          %643 = vdwg.mxu0
          %644 = vst [vmem:[%s388] sm:$0xff] %v638
          %645 = vst [vmem:[%s388 + $0x8] sm:$0xff] %v641
        $region68: #{tpu_custom_call.1} parent=43 // pred_fallthru
          _
        %s646 = sand.u32 %s180, 1
        %s647 = scalar_lea.sflag [#allocation4], %s646
        %s648 = sand.u32 %s180, 1
        %s649 = smul.addr %s648, 16
        %s650 = scalar_lea.vmem [#allocation10], %s649
        %s651 = sand.u32 %s206, 1
        %s652 = scalar_lea.sflag [#allocation12], %s651
        %s653 = sand.u32 %s206, 1
        %s654 = smul.addr %s653, 16
        %s655 = scalar_lea.vmem [#allocation11], %s654
        // Predicated region
        $region69: #{tpu_custom_call.1} parent=43 // pred_check
          %p656 = pneg %p190
        $region70: #{tpu_custom_call.1} parent=43 // pred_check_branch
          %658 = sbr.rel (%p656) target = $region72
        $region71: #{tpu_custom_call.1} parent=43 // pred_region
          %s659 = smul.u32 2, %s32
          %s661 = ssub.s32 256, 256
          %662 = vsyncadd %s647, %s661
          %s663 = smul.addr %s659, 128
          %s664 = scalar_lea.hbm %s6, %s663
          %s665 = sshll.u32 %s650, 4
          %s666 = int_to_ptr.vmem [resolvable:$true] %s665
          %671 = dma.vmem_to_hbm [thread:$0]  %s666, 256, %s664, %s647, 128, 128, 8
        $region72: #{tpu_custom_call.1} parent=43 // pred_fallthru
          _
        // Predicated region
        $region73: #{tpu_custom_call.1} parent=43 // pred_check
          %p672 = pneg %p216
        $region74: #{tpu_custom_call.1} parent=43 // pred_check_branch
          %674 = sbr.rel (%p672) target = $region76
        $region75: #{tpu_custom_call.1} parent=43 // pred_region
          %s675 = smul.u32 2, %s32
          %s676 = ssub.s32 3, %s675
          %p677 = scmp.lt.s32.totalorder %s676, 2
          %s678 = scalar_select %p677, %s676, 2
          %s679 = smul.u32 128, %s678
          %s681 = ssub.s32 256, %s679
          %682 = vsyncadd %s652, %s681
          %p683 = scmp.ne.s32.totalorder 0, %s679
          %s684 = smul.addr %s675, 128
          %s685 = scalar_lea.hbm %s7, %s684
          %s686 = smul.u32 8, %s678
          %s687 = sshll.u32 %s655, 4
          %s688 = int_to_ptr.vmem [resolvable:$true] %s687
          %s689 = sshll.u32 %s686, 4
          %693 = dma.vmem_to_hbm [thread:$0]  (%p683), %s688, %s689, %s685, %s652, 128, 128, 8
        $region76: #{tpu_custom_call.1} parent=43 // pred_fallthru
          _
      $region44: #{tpu_custom_call.1} parent=5 // pred_fallthru
        _
      %p694 = scmp.le.s32.totalorder 2, %s27
      // Predicated region
      $region77: #{tpu_custom_call.1} parent=5 // pred_check
        %p695 = pneg %p694
      $region78: #{tpu_custom_call.1} parent=5 // pred_check_branch
        %697 = sbr.rel (%p695) target = $region80
      $region79: #{tpu_custom_call.1} parent=5 // pred_region
        %s698 = ssub.s32 %s27, 2
        // Predicated region
        $region81: #{tpu_custom_call.1} parent=79 // pred_check
          %p699 = pneg %p196
        $region82: #{tpu_custom_call.1} parent=79 // pred_check_branch
          %701 = sbr.rel (%p699) target = $region84
        $region83: #{tpu_custom_call.1} parent=79 // pred_region
          %s702 = sand.u32 %s181, 1
          %s703 = scalar_lea.sflag [#allocation4], %s702
          %s704 = sand.u32 %s181, 1
          %s705 = smul.addr %s704, 16
          %s706 = scalar_lea.vmem [#allocation10], %s705
          %707 = dma.done %s703, 256
        $region84: #{tpu_custom_call.1} parent=79 // pred_fallthru
          _
        // Predicated region
        $region85: #{tpu_custom_call.1} parent=79 // pred_check
          %p708 = pneg %p222
        $region86: #{tpu_custom_call.1} parent=79 // pred_check_branch
          %710 = sbr.rel (%p708) target = $region88
        $region87: #{tpu_custom_call.1} parent=79 // pred_region
          %s711 = sand.u32 %s207, 1
          %s712 = scalar_lea.sflag [#allocation12], %s711
          %s713 = sand.u32 %s207, 1
          %s714 = smul.addr %s713, 16
          %s715 = scalar_lea.vmem [#allocation11], %s714
          %716 = dma.done %s712, 256
        $region88: #{tpu_custom_call.1} parent=79 // pred_fallthru
          _
      $region80: #{tpu_custom_call.1} parent=5 // pred_fallthru
        _
    $region6: #{tpu_custom_call.1} parent=1 // loop_footer
      %s31 = sadd.s32 1, %s27
    $region7: #{tpu_custom_call.1} parent=1 // loop_footer_branch
      %26 = sbr.rel target = $region3
    $region8: #{tpu_custom_call.1} parent=1 // loop_exit
      _
    %717 = vsyncpa [#allocation3], 1
    %s718 = scalar_lea.sflag [#allocation3], 1
    %719 = vsyncpa %s718, 1
    %720 = vsyncpa [#allocation6], 1
    %s721 = scalar_lea.sflag [#allocation6], 1
    %722 = vsyncpa %s721, 1
    %723 = vsyncpa [#allocation9], 1
    %724 = vsyncpa [#allocation4], 1
    %s725 = scalar_lea.sflag [#allocation4], 1
    %726 = vsyncpa %s725, 1
    %727 = vsyncpa [#allocation12], 1
    %s728 = scalar_lea.sflag [#allocation12], 1
    %729 = vsyncpa %s728, 1

</llo_original>
